<compile_context>
chip_gen: v7x
topology: tpu7x:2x2x1
jax: 0.10.0
libtpu: 0.0.40
codegen_flags: <defaults>
</compile_context>

<pallas_src>
import jax
import jax.numpy as jnp
from jax.experimental import pallas as pl
from jax.experimental.pallas import tpu as pltpu


def _leaky_relu_02(v):
    # slope 0.2 is positive => max(v, 0.2*v) == where(v > 0, v, 0.2*v)
    return jnp.maximum(v, 0.2 * v)


def _decoder_kernel(x_ref, w1_ref, b1_ref, w2_ref, b2_ref, w3_ref, b3_ref,
                    out_ref):
    # Layer 1: Linear + LeakyReLU(0.2)   (f32 accumulate, bias in f32)
    h = jnp.dot(x_ref[...], w1_ref[...],
                preferred_element_type=jnp.float32) + b1_ref[...]
    h = _leaky_relu_02(h)

    # Layer 2: Linear + LeakyReLU(0.2)
    h = h.astype(w2_ref.dtype)  # identity for f32; keeps MXU bf16 path for bf16
    h = jnp.dot(h, w2_ref[...],
                preferred_element_type=jnp.float32) + b2_ref[...]
    h = _leaky_relu_02(h)

    # Output layer: Linear + sigmoid
    h = h.astype(w3_ref.dtype)
    o = jnp.dot(h, w3_ref[...],
                preferred_element_type=jnp.float32) + b3_ref[...]
    out_ref[...] = jax.nn.sigmoid(o).astype(out_ref.dtype)


def _round_up(n, m):
    return ((n + m - 1) // m) * m


def _pad2d(a, rows, cols):
    return jnp.pad(a, ((0, rows - a.shape[0]), (0, cols - a.shape[1])))


def decoder_forward(x, params, *, compute_dtype=jnp.float32, max_batch_tile=256):
    """x: [B, latent_dim].  params: dict of (w, b) per layer with weights
    stored pre-transposed as [in_dim, out_dim] and biases as [1, out_dim]."""
    w1, b1 = params["fc_hidden"]
    w2, b2 = params["fc_hidden2"]
    w3, b3 = params["fc_output"]

    B, latent_dim = x.shape
    hidden_dim = w1.shape[1]
    output_dim = w3.shape[1]

    # Lane-dense feature dims (multiples of 128).
    hid_p = _round_up(hidden_dim, 128)
    out_p = _round_up(output_dim, 128)

    # Batch tiling: TB multiple of 8, capped; pad B up to a multiple of TB.
    TB = min(max_batch_tile, _round_up(B, 8))
    B_p = _round_up(B, TB)

    x_p = _pad2d(x, B_p, latent_dim).astype(compute_dtype)
    w1_p = _pad2d(w1, latent_dim, hid_p).astype(compute_dtype)
    b1_p = _pad2d(b1, 1, hid_p).astype(jnp.float32)
    w2_p = _pad2d(w2, hid_p, hid_p).astype(compute_dtype)
    b2_p = _pad2d(b2, 1, hid_p).astype(jnp.float32)
    w3_p = _pad2d(w3, hid_p, out_p).astype(compute_dtype)
    b3_p = _pad2d(b3, 1, out_p).astype(jnp.float32)

    # Weights/biases stay resident in VMEM across all batch-tile grid steps
    # (index_map returns the same block every step -> no re-DMA).
    resident = lambda a: pl.BlockSpec(a.shape, lambda i: (0, 0))

    y_p = pl.pallas_call(
        _decoder_kernel,
        out_shape=jax.ShapeDtypeStruct((B_p, out_p), jnp.float32),
        grid_spec=pltpu.PrefetchScalarGridSpec(
            num_scalar_prefetch=0,
            grid=(B_p // TB,),
            in_specs=[
                pl.BlockSpec((TB, latent_dim), lambda i: (i, 0)),
                resident(w1_p), resident(b1_p),
                resident(w2_p), resident(b2_p),
                resident(w3_p), resident(b3_p),
            ],
            out_specs=pl.BlockSpec((TB, out_p), lambda i: (i, 0)),
        ),
        compiler_params=pltpu.CompilerParams(
            dimension_semantics=("parallel",)),
    )(x_p, w1_p, b1_p, w2_p, b2_p, w3_p, b3_p)

    return y_p[:B, :output_dim]


def init_decoder_params(key, latent_dim, hidden_dim, output_dim):
    """Deterministic synthetic init (PyTorch-Linear-like uniform ranges).
    Weights are stored pre-transposed as [in_dim, out_dim]."""
    def linear(k, in_dim, out_dim):
        kw, kb = jax.random.split(k)
        bound = 1.0 / jnp.sqrt(jnp.float32(in_dim))
        w = jax.random.uniform(kw, (in_dim, out_dim), jnp.float32, -bound, bound)
        b = jax.random.uniform(kb, (1, out_dim), jnp.float32, -bound, bound)
        return w, b

    k1, k2, k3 = jax.random.split(key, 3)
    return {
        "fc_hidden": linear(k1, latent_dim, hidden_dim),
        "fc_hidden2": linear(k2, hidden_dim, hidden_dim),
        "fc_output": linear(k3, hidden_dim, output_dim),
    }


def decoder_ref(x, params):
    """Pure-JAX f32 reference for correctness checking."""
    w1, b1 = params["fc_hidden"]
    w2, b2 = params["fc_hidden2"]
    w3, b3 = params["fc_output"]
    lrelu = lambda v: jnp.where(v > 0, v, 0.2 * v)
    h = lrelu(x @ w1 + b1)
    h = lrelu(h @ w2 + b2)
    return jax.nn.sigmoid(h @ w3 + b3)


if __name__ == "__main__":
    latent_dim, hidden_dim, output_dim = 16, 32, 64

    key = jax.random.PRNGKey(0)
    kx, kp, kx2 = jax.random.split(key, 3)
    params = init_decoder_params(kp, latent_dim, hidden_dim, output_dim)

    # 1) Small batch, f32 compute — tight correctness check.
    batch = 8
    x = jax.random.normal(kx, (batch, latent_dim), jnp.float32)
    out = decoder_forward(x, params, compute_dtype=jnp.float32)
    jax.block_until_ready(out)
    ref = decoder_ref(x, params)
    assert out.shape == (batch, output_dim)
    assert jnp.allclose(out, ref, atol=1e-5, rtol=1e-5)

    # 2) Larger, non-tile-aligned batch exercising the multi-step batch grid
    #    and bf16 weights/activations on the MXU (f32 accumulation).
    batch2 = 300
    x2 = jax.random.normal(kx2, (batch2, latent_dim), jnp.float32)
    out2_f32 = decoder_forward(x2, params, compute_dtype=jnp.float32)
    out2_bf16 = decoder_forward(x2, params, compute_dtype=jnp.bfloat16)
    jax.block_until_ready((out2_f32, out2_bf16))
    ref2 = decoder_ref(x2, params)
    assert out2_f32.shape == (batch2, output_dim)
    assert jnp.allclose(out2_f32, ref2, atol=1e-5, rtol=1e-5)
    assert jnp.allclose(out2_bf16, ref2, atol=5e-2)

    print("KERNEL_OK")
</pallas_src>

<mosaic_0001>
module attributes {stable_mosaic.version = 11 : i64} {
  func.func @_decoder_kernel(%arg0: i32, %arg1: memref<8x16xf32, #tpu.memory_space<vmem>>, %arg2: memref<16x128xf32, #tpu.memory_space<vmem>>, %arg3: memref<1x128xf32, #tpu.memory_space<vmem>>, %arg4: memref<128x128xf32, #tpu.memory_space<vmem>>, %arg5: memref<1x128xf32, #tpu.memory_space<vmem>>, %arg6: memref<128x128xf32, #tpu.memory_space<vmem>>, %arg7: memref<1x128xf32, #tpu.memory_space<vmem>>, %arg8: memref<8x128xf32, #tpu.memory_space<vmem>>) attributes {dimension_semantics = [#tpu.dimension_semantics<parallel>], iteration_bounds = array<i64: 1>, scalar_prefetch = 0 : i64, scratch_operands = 0 : i64, tpu.core_type = #tpu.core_type<tc>, window_params = [{transform_indices = @transform_0, window_bounds = array<i64: 8, 16>}, {pipeline_mode = #tpu.pipeline_mode<synchronous>, transform_indices = @transform_1, window_bounds = array<i64: 16, 128>}, {pipeline_mode = #tpu.pipeline_mode<synchronous>, transform_indices = @transform_2, window_bounds = array<i64: 1, 128>}, {pipeline_mode = #tpu.pipeline_mode<synchronous>, transform_indices = @transform_3, window_bounds = array<i64: 128, 128>}, {pipeline_mode = #tpu.pipeline_mode<synchronous>, transform_indices = @transform_4, window_bounds = array<i64: 1, 128>}, {pipeline_mode = #tpu.pipeline_mode<synchronous>, transform_indices = @transform_5, window_bounds = array<i64: 128, 128>}, {pipeline_mode = #tpu.pipeline_mode<synchronous>, transform_indices = @transform_6, window_bounds = array<i64: 1, 128>}, {transform_indices = @transform_7, window_bounds = array<i64: 8, 128>}]} {
    %c0 = arith.constant 0 : index
    %c0_0 = arith.constant 0 : index
    %0 = vector.load %arg1[%c0, %c0_0] : memref<8x16xf32, #tpu.memory_space<vmem>>, vector<8x16xf32>
    %c0_1 = arith.constant 0 : index
    %c0_2 = arith.constant 0 : index
    %1 = vector.load %arg2[%c0_1, %c0_2] : memref<16x128xf32, #tpu.memory_space<vmem>>, vector<16x128xf32>
    %cst = arith.constant dense<0.000000e+00> : vector<8x128xf32>
    %2 = tpu.matmul %0, %1, %cst {dimension_numbers = #tpu.dot_dimension_numbers<[1], [0], [0], [1], [0, 0, 1, 1], [], []>} : vector<8x16xf32>, vector<16x128xf32>, vector<8x128xf32> -> vector<8x128xf32>
    %c0_3 = arith.constant 0 : index
    %c0_4 = arith.constant 0 : index
    %3 = vector.load %arg3[%c0_3, %c0_4] : memref<1x128xf32, #tpu.memory_space<vmem>>, vector<1x128xf32>
    %4 = vector.broadcast %3 : vector<1x128xf32> to vector<8x128xf32>
    %5 = arith.addf %2, %4 : vector<8x128xf32>
    %cst_5 = arith.constant 2.000000e-01 : f32
    %6 = vector.broadcast %cst_5 : f32 to vector<8x128xf32>
    %7 = arith.mulf %6, %5 : vector<8x128xf32>
    %8 = arith.maximumf %5, %7 : vector<8x128xf32>
    %c0_6 = arith.constant 0 : index
    %c0_7 = arith.constant 0 : index
    %9 = vector.load %arg4[%c0_6, %c0_7] : memref<128x128xf32, #tpu.memory_space<vmem>>, vector<128x128xf32>
    %cst_8 = arith.constant dense<0.000000e+00> : vector<8x128xf32>
    %10 = tpu.matmul %8, %9, %cst_8 {dimension_numbers = #tpu.dot_dimension_numbers<[1], [0], [0], [1], [0, 0, 1, 1], [], []>} : vector<8x128xf32>, vector<128x128xf32>, vector<8x128xf32> -> vector<8x128xf32>
    %c0_9 = arith.constant 0 : index
    %c0_10 = arith.constant 0 : index
    %11 = vector.load %arg5[%c0_9, %c0_10] : memref<1x128xf32, #tpu.memory_space<vmem>>, vector<1x128xf32>
    %12 = vector.broadcast %11 : vector<1x128xf32> to vector<8x128xf32>
    %13 = arith.addf %10, %12 : vector<8x128xf32>
    %cst_11 = arith.constant 2.000000e-01 : f32
    %14 = vector.broadcast %cst_11 : f32 to vector<8x128xf32>
    %15 = arith.mulf %14, %13 : vector<8x128xf32>
    %16 = arith.maximumf %13, %15 : vector<8x128xf32>
    %c0_12 = arith.constant 0 : index
    %c0_13 = arith.constant 0 : index
    %17 = vector.load %arg6[%c0_12, %c0_13] : memref<128x128xf32, #tpu.memory_space<vmem>>, vector<128x128xf32>
    %cst_14 = arith.constant dense<0.000000e+00> : vector<8x128xf32>
    %18 = tpu.matmul %16, %17, %cst_14 {dimension_numbers = #tpu.dot_dimension_numbers<[1], [0], [0], [1], [0, 0, 1, 1], [], []>} : vector<8x128xf32>, vector<128x128xf32>, vector<8x128xf32> -> vector<8x128xf32>
    %c0_15 = arith.constant 0 : index
    %c0_16 = arith.constant 0 : index
    %19 = vector.load %arg7[%c0_15, %c0_16] : memref<1x128xf32, #tpu.memory_space<vmem>>, vector<1x128xf32>
    %20 = vector.broadcast %19 : vector<1x128xf32> to vector<8x128xf32>
    %21 = arith.addf %18, %20 : vector<8x128xf32>
    %22 = arith.negf %21 : vector<8x128xf32>
    %23 = math.exp %22 : vector<8x128xf32>
    %cst_17 = arith.constant 1.000000e+00 : f32
    %24 = vector.broadcast %cst_17 : f32 to vector<8x128xf32>
    %25 = arith.addf %24, %23 : vector<8x128xf32>
    %26 = arith.divf %24, %25 : vector<8x128xf32>
    %c0_18 = arith.constant 0 : index
    %c0_19 = arith.constant 0 : index
    %27 = vector.load %arg8[%c0_18, %c0_19] : memref<8x128xf32, #tpu.memory_space<vmem>>, vector<8x128xf32>
    tpu.vector_store %arg8[%c0_18, %c0_19], %26 {strides = array<i32>} : memref<8x128xf32, #tpu.memory_space<vmem>>, vector<8x128xf32>,
    return
  }
  func.func @transform_0(%arg0: i32) -> (i32, i32) {
    %c0_i32 = arith.constant 0 : i32
    %c0_i32_0 = arith.constant 0 : i32
    return %arg0, %c0_i32 : i32, i32
  }
  func.func @transform_1(%arg0: i32) -> (i32, i32) {
    %c0_i32 = arith.constant 0 : i32
    %c0_i32_0 = arith.constant 0 : i32
    %c0_i32_1 = arith.constant 0 : i32
    return %c0_i32, %c0_i32_0 : i32, i32
  }
  func.func @transform_2(%arg0: i32) -> (i32, i32) {
    %c0_i32 = arith.constant 0 : i32
    %c0_i32_0 = arith.constant 0 : i32
    %c0_i32_1 = arith.constant 0 : i32
    return %c0_i32, %c0_i32_0 : i32, i32
  }
  func.func @transform_3(%arg0: i32) -> (i32, i32) {
    %c0_i32 = arith.constant 0 : i32
    %c0_i32_0 = arith.constant 0 : i32
    %c0_i32_1 = arith.constant 0 : i32
    return %c0_i32, %c0_i32_0 : i32, i32
  }
  func.func @transform_4(%arg0: i32) -> (i32, i32) {
    %c0_i32 = arith.constant 0 : i32
    %c0_i32_0 = arith.constant 0 : i32
    %c0_i32_1 = arith.constant 0 : i32
    return %c0_i32, %c0_i32_0 : i32, i32
  }
  func.func @transform_5(%arg0: i32) -> (i32, i32) {
    %c0_i32 = arith.constant 0 : i32
    %c0_i32_0 = arith.constant 0 : i32
    %c0_i32_1 = arith.constant 0 : i32
    return %c0_i32, %c0_i32_0 : i32, i32
  }
  func.func @transform_6(%arg0: i32) -> (i32, i32) {
    %c0_i32 = arith.constant 0 : i32
    %c0_i32_0 = arith.constant 0 : i32
    %c0_i32_1 = arith.constant 0 : i32
    return %c0_i32, %c0_i32_0 : i32, i32
  }
  func.func @transform_7(%arg0: i32) -> (i32, i32) {
    %c0_i32 = arith.constant 0 : i32
    %c0_i32_0 = arith.constant 0 : i32
    return %arg0, %c0_i32 : i32, i32
  }
}

</mosaic_0001>

<llo_original>
// kernel: tpu_custom_call.1
$region0: #{tpu_custom_call.1}
  #allocation0 [shape = 'u32[]', space=smem, size = 0x4, offset = 0x4, fixed_abs, tag = 'smem constant byte address 0x4 - core index']
  #allocation1 [shape = 'u32[144,128]{1,0:T(1,128)}', space=vmem, size = 0x12000, scoped, tag = 'internal scratch']
  %s0 = inlined_call_operand.hbm [shape: f32[8,16], index: 0, kind: input, shape index: {}]
  %s1 = inlined_call_operand.hbm [shape: f32[16,128], index: 1, kind: input, shape index: {}]
  %s2 = inlined_call_operand.vmem [shape: f32[1,128], index: 2, kind: input, shape index: {}]
  %s3 = inlined_call_operand.hbm [shape: f32[128,128], index: 3, kind: input, shape index: {}]
  %s4 = inlined_call_operand.vmem [shape: f32[1,128], index: 4, kind: input, shape index: {}]
  %s5 = inlined_call_operand.hbm [shape: f32[128,128], index: 5, kind: input, shape index: {}]
  %s6 = inlined_call_operand.vmem [shape: f32[1,128], index: 6, kind: input, shape index: {}]
  %s7 = inlined_call_operand.hbm [shape: f32[8,128], index: 7, kind: output, shape index: {}]
  %s8 = sld [smem:[#allocation0]]
  $region54: #{tpu_custom_call.1} parent=0
    _
  %s10 = ssub.s32 1, %s8
  %s11 = scalar_select 0, %s10, %s8
  $region1: #{tpu_custom_call.1} parent=0
    #allocation2 [shape = 'u8[4096]{0}', space=vmem, size = 0x1000, scoped, tag = 'input window, operand 0, single buffered']
    #allocation3 [shape = 's32[1]{0}', space=sflag, size = 0x4, scoped, tag = 'scoped memory for tpu_custom_call.1']
    #allocation4 [shape = 's32[1]{0}', space=sflag, size = 0x4, scoped, tag = 'scoped memory for tpu_custom_call.1']
    #allocation5 [shape = 'u8[8192]{0}', space=vmem, size = 0x2000, scoped, tag = 'input window, operand 1, single buffered']
    #allocation6 [shape = 's32[1]{0}', space=sflag, size = 0x4, scoped, tag = 'scoped memory for tpu_custom_call.1']
    #allocation7 [shape = 'u8[65536]{0}', space=vmem, size = 0x10000, scoped, tag = 'input window, operand 3, single buffered']
    #allocation8 [shape = 'u8[65536]{0}', space=vmem, size = 0x10000, scoped, tag = 'input window, operand 5, single buffered']
    #allocation9 [shape = 's32[1]{0}', space=sflag, size = 0x4, scoped, tag = 'scoped memory for tpu_custom_call.1']
    #allocation10 [shape = 'u8[4096]{0}', space=vmem, size = 0x1000, scoped, tag = 'output window, operand 0, single buffered']
    %12 = vsyncpa [#allocation3], 0
    %13 = vsyncpa [#allocation6], 0
    %14 = vsyncpa [#allocation9], 0
    %15 = vsyncpa [#allocation4], 0
    // Predicated region
    $region2: #{tpu_custom_call.1} parent=1 // pred_check
      _
    $region3: #{tpu_custom_call.1} parent=1 // pred_check_branch
      %17 = sbr.rel (0) target = $region5
    $region4: #{tpu_custom_call.1} parent=1 // pred_region
      %s19 = ssub.s32 128, 128
      %20 = vsyncadd [#allocation3], %s19
      %s22 = sshll.u32 [#allocation2], 4
      %s23 = int_to_ptr.vmem [resolvable:$true] %s22
      %25 = dma.hbm_to_vmem [thread:$0]  %s0, 128, %s23, [#allocation3]
    $region5: #{tpu_custom_call.1} parent=1 // pred_fallthru
      _
    // Predicated region
    $region6: #{tpu_custom_call.1} parent=1 // pred_check
      _
    $region7: #{tpu_custom_call.1} parent=1 // pred_check_branch
      %27 = sbr.rel (0) target = $region9
    $region8: #{tpu_custom_call.1} parent=1 // pred_region
      %s29 = ssub.s32 256, 256
      %30 = vsyncadd [#allocation6], %s29
      %s31 = sshll.u32 [#allocation5], 4
      %s32 = int_to_ptr.vmem [resolvable:$true] %s31
      %37 = dma.hbm_to_vmem [thread:$0]  %s1, 256, %s32, [#allocation6], 128, 128, 8
    $region9: #{tpu_custom_call.1} parent=1 // pred_fallthru
      _
    // Predicated region
    $region10: #{tpu_custom_call.1} parent=1 // pred_check
      _
    $region11: #{tpu_custom_call.1} parent=1 // pred_check_branch
      %39 = sbr.rel (0) target = $region13
    $region12: #{tpu_custom_call.1} parent=1 // pred_region
      _
    $region13: #{tpu_custom_call.1} parent=1 // pred_fallthru
      _
    // Predicated region
    $region14: #{tpu_custom_call.1} parent=1 // pred_check
      _
    $region15: #{tpu_custom_call.1} parent=1 // pred_check_branch
      %41 = sbr.rel (0) target = $region17
    $region16: #{tpu_custom_call.1} parent=1 // pred_region
      %s43 = ssub.s32 2048, 2048
      %44 = vsyncadd [#allocation6], %s43
      %s45 = sshll.u32 [#allocation7], 4
      %s46 = int_to_ptr.vmem [resolvable:$true] %s45
      %51 = dma.hbm_to_vmem [thread:$0]  %s3, 2048, %s46, [#allocation6], 128, 128, 8
    $region17: #{tpu_custom_call.1} parent=1 // pred_fallthru
      _
    // Predicated region
    $region18: #{tpu_custom_call.1} parent=1 // pred_check
      _
    $region19: #{tpu_custom_call.1} parent=1 // pred_check_branch
      %53 = sbr.rel (0) target = $region21
    $region20: #{tpu_custom_call.1} parent=1 // pred_region
      _
    $region21: #{tpu_custom_call.1} parent=1 // pred_fallthru
      _
    // Predicated region
    $region22: #{tpu_custom_call.1} parent=1 // pred_check
      _
    $region23: #{tpu_custom_call.1} parent=1 // pred_check_branch
      %55 = sbr.rel (0) target = $region25
    $region24: #{tpu_custom_call.1} parent=1 // pred_region
      %s57 = ssub.s32 2048, 2048
      %58 = vsyncadd [#allocation9], %s57
      %s59 = sshll.u32 [#allocation8], 4
      %s60 = int_to_ptr.vmem [resolvable:$true] %s59
      %65 = dma.hbm_to_vmem [thread:$0]  %s5, 2048, %s60, [#allocation9], 128, 128, 8
    $region25: #{tpu_custom_call.1} parent=1 // pred_fallthru
      _
    // Predicated region
    $region26: #{tpu_custom_call.1} parent=1 // pred_check
      _
    $region27: #{tpu_custom_call.1} parent=1 // pred_check_branch
      %67 = sbr.rel (0) target = $region29
    $region28: #{tpu_custom_call.1} parent=1 // pred_region
      _
    $region29: #{tpu_custom_call.1} parent=1 // pred_fallthru
      _
    // Predicated region
    $region30: #{tpu_custom_call.1} parent=1 // pred_check
      _
    $region31: #{tpu_custom_call.1} parent=1 // pred_check_branch
      %69 = sbr.rel (0) target = $region33
    $region32: #{tpu_custom_call.1} parent=1 // pred_region
      %70 = dma.done [#allocation3], 128
    $region33: #{tpu_custom_call.1} parent=1 // pred_fallthru
      _
    // Predicated region
    $region34: #{tpu_custom_call.1} parent=1 // pred_check
      _
    $region35: #{tpu_custom_call.1} parent=1 // pred_check_branch
      %72 = sbr.rel (0) target = $region37
    $region36: #{tpu_custom_call.1} parent=1 // pred_region
      %73 = dma.done [#allocation6], 256
    $region37: #{tpu_custom_call.1} parent=1 // pred_fallthru
      _
    // Predicated region
    $region38: #{tpu_custom_call.1} parent=1 // pred_check
      _
    $region39: #{tpu_custom_call.1} parent=1 // pred_check_branch
      %75 = sbr.rel (0) target = $region41
    $region40: #{tpu_custom_call.1} parent=1 // pred_region
      %76 = dma.done [#allocation6], 2048
    $region41: #{tpu_custom_call.1} parent=1 // pred_fallthru
      _
    // Predicated region
    $region42: #{tpu_custom_call.1} parent=1 // pred_check
      _
    $region43: #{tpu_custom_call.1} parent=1 // pred_check_branch
      %78 = sbr.rel (0) target = $region45
    $region44: #{tpu_custom_call.1} parent=1 // pred_region
      %79 = dma.done [#allocation9], 2048
    $region45: #{tpu_custom_call.1} parent=1 // pred_fallthru
      _
    %v80 = vld [vmem:[#allocation2] sm:$0xff]
    %v81 = vld [vmem:[#allocation5] sm:$0xff]
    %v82 = vld [vmem:[#allocation5 + $0x8] sm:$0xff]
    %v83 = vld [vmem:[%s2] sm:$0x1]
    %v85 = vlaneseq
    %v86 = vshrl.u32 %v85, 7
    %v87 = vsub.s32 0, %v86
    %v88 = vrot.slane %v83, %v87
    %vm90 = vcmask 130048
    %v92 = vsel %vm90, %v80, 0
    %94 = vmatprep.subr.mxu0 0.0
    %95 = vmatpush1.msra.mxu0 %v81
    %96 = vmatprep.subr.mxu0 0.0
    %97 = vmatpush1.msra.mxu0 %v82
    %98 = vmatprep.subr.mxu0 0.0
    %99 = vmatpush1.msra.mxu0 0.0
    %100 = vmatprep.subr.mxu0 0.0
    %101 = vmatpush1.msra.mxu0 0.0
    %102 = vmatprep.subr.mxu0 0.0
    %103 = vmatpush1.msra.mxu0 0.0
    %104 = vmatprep.subr.mxu0 0.0
    %105 = vmatpush1.msra.mxu0 0.0
    %106 = vmatprep.subr.mxu0 0.0
    %107 = vmatpush1.msra.mxu0 0.0
    %108 = vmatprep.subr.mxu0 0.0
    %109 = vmatpush1.msra.mxu0 0.0
    %110 = vmatprep.subr.mxu0 0.0
    %111 = vmatpush1.msra.mxu0 0.0
    %112 = vmatprep.subr.mxu0 0.0
    %113 = vmatpush1.msra.mxu0 0.0
    %114 = vmatprep.subr.mxu0 0.0
    %115 = vmatpush1.msra.mxu0 0.0
    %116 = vmatprep.subr.mxu0 0.0
    %117 = vmatpush1.msra.mxu0 0.0
    %118 = vmatprep.subr.mxu0 0.0
    %119 = vmatpush1.msra.mxu0 0.0
    %120 = vmatprep.subr.mxu0 0.0
    %121 = vmatpush1.msra.mxu0 0.0
    %122 = vmatprep.subr.mxu0 0.0
    %123 = vmatpush1.msra.mxu0 0.0
    %124 = vmatprep.subr.mxu0 0.0
    %125 = vmatpush1.msra.mxu0 0.0
    %126 = vmatprep.subr.mxu0 0.0
    %127 = vmatpush1.msra.mxu0 0.0
    %128 = vmatprep.subr.mxu0 0.0
    %129 = vmatpush1.msra.mxu0 0.0
    %130 = vmatprep.subr.mxu0 0.0
    %131 = vmatpush1.msra.mxu0 0.0
    %132 = vmatprep.subr.mxu0 0.0
    %133 = vmatpush1.msra.mxu0 0.0
    %134 = vmatprep.subr.mxu0 0.0
    %135 = vmatpush1.msra.mxu0 0.0
    %136 = vmatprep.subr.mxu0 0.0
    %137 = vmatpush1.msra.mxu0 0.0
    %138 = vmatprep.subr.mxu0 0.0
    %139 = vmatpush1.msra.mxu0 0.0
    %140 = vmatprep.subr.mxu0 0.0
    %141 = vmatpush1.msra.mxu0 0.0
    %142 = vmatprep.subr.mxu0 0.0
    %143 = vmatpush1.msra.mxu0 0.0
    %144 = vmatprep.subr.mxu0 0.0
    %145 = vmatpush1.msra.mxu0 0.0
    %146 = vmatprep.subr.mxu0 0.0
    %147 = vmatpush1.msra.mxu0 0.0
    %148 = vmatprep.subr.mxu0 0.0
    %149 = vmatpush1.msra.mxu0 0.0
    %150 = vmatprep.subr.mxu0 0.0
    %151 = vmatpush1.msra.mxu0 0.0
    %152 = vmatprep.subr.mxu0 0.0
    %153 = vmatpush1.msra.mxu0 0.0
    %154 = vmatprep.subr.mxu0 0.0
    %155 = vmatpush1.msra.mxu0 0.0
    %156 = vmatprep.subr.mxu0 0.0
    %157 = vmatpush1.msra.mxu0 0.0
    %158 = vmatprep.mubr.f32.mxu0 0.0
    %159 = vmatmul.mubr.f32.gmra.mrb[0].mxu0 %v92
    %v160 = vpop.f32.mrb[0].mxu0
    %v161 = vadd.f32 %v88, %v160
    %v162 = vpop.f32.mrb[0].mxu0
    %163 = vdwg.mxu0
    %v164 = vmul.f32 %v161, 0.2
    %v165 = vmax.f32 %v161, %v164
    %v166 = vld [vmem:[#allocation7] sm:$0xff]
    %v167 = vld [vmem:[#allocation7 + $0x8] sm:$0xff]
    %v168 = vld [vmem:[#allocation7 + $0x10] sm:$0xff]
    %v169 = vld [vmem:[#allocation7 + $0x18] sm:$0xff]
    %v170 = vld [vmem:[#allocation7 + $0x20] sm:$0xff]
    %v171 = vld [vmem:[#allocation7 + $0x28] sm:$0xff]
    %v172 = vld [vmem:[#allocation7 + $0x30] sm:$0xff]
    %v173 = vld [vmem:[#allocation7 + $0x38] sm:$0xff]
    %v174 = vld [vmem:[#allocation7 + $0x40] sm:$0xff]
    %v175 = vld [vmem:[#allocation7 + $0x48] sm:$0xff]
    %v176 = vld [vmem:[#allocation7 + $0x50] sm:$0xff]
    %v177 = vld [vmem:[#allocation7 + $0x58] sm:$0xff]
    %v178 = vld [vmem:[#allocation7 + $0x60] sm:$0xff]
    %v179 = vld [vmem:[#allocation7 + $0x68] sm:$0xff]
    %v180 = vld [vmem:[#allocation7 + $0x70] sm:$0xff]
    %v181 = vld [vmem:[#allocation7 + $0x78] sm:$0xff]
    %v182 = vld [vmem:[%s4] sm:$0x1]
    %v184 = vlaneseq
    %v185 = vshrl.u32 %v184, 7
    %v186 = vsub.s32 0, %v185
    %v187 = vrot.slane %v182, %v186
    %189 = vmatprep.subr.mxu0 0.0
    %190 = vmatpush1.msra.mxu0 %v166
    %191 = vmatprep.subr.mxu0 0.0
    %192 = vmatpush1.msra.mxu0 %v167
    %193 = vmatprep.subr.mxu0 0.0
    %194 = vmatpush1.msra.mxu0 %v168
    %195 = vmatprep.subr.mxu0 0.0
    %196 = vmatpush1.msra.mxu0 %v169
    %197 = vmatprep.subr.mxu0 0.0
    %198 = vmatpush1.msra.mxu0 %v170
    %199 = vmatprep.subr.mxu0 0.0
    %200 = vmatpush1.msra.mxu0 %v171
    %201 = vmatprep.subr.mxu0 0.0
    %202 = vmatpush1.msra.mxu0 %v172
    %203 = vmatprep.subr.mxu0 0.0
    %204 = vmatpush1.msra.mxu0 %v173
    %205 = vmatprep.subr.mxu0 0.0
    %206 = vmatpush1.msra.mxu0 %v174
    %207 = vmatprep.subr.mxu0 0.0
    %208 = vmatpush1.msra.mxu0 %v175
    %209 = vmatprep.subr.mxu0 0.0
    %210 = vmatpush1.msra.mxu0 %v176
    %211 = vmatprep.subr.mxu0 0.0
    %212 = vmatpush1.msra.mxu0 %v177
    %213 = vmatprep.subr.mxu0 0.0
    %214 = vmatpush1.msra.mxu0 %v178
    %215 = vmatprep.subr.mxu0 0.0
    %216 = vmatpush1.msra.mxu0 %v179
    %217 = vmatprep.subr.mxu0 0.0
    %218 = vmatpush1.msra.mxu0 %v180
    %219 = vmatprep.subr.mxu0 0.0
    %220 = vmatpush1.msra.mxu0 %v181
    %221 = vmatprep.subr.mxu0 0.0
    %222 = vmatpush1.msra.mxu0 0.0
    %223 = vmatprep.subr.mxu0 0.0
    %224 = vmatpush1.msra.mxu0 0.0
    %225 = vmatprep.subr.mxu0 0.0
    %226 = vmatpush1.msra.mxu0 0.0
    %227 = vmatprep.subr.mxu0 0.0
    %228 = vmatpush1.msra.mxu0 0.0
    %229 = vmatprep.subr.mxu0 0.0
    %230 = vmatpush1.msra.mxu0 0.0
    %231 = vmatprep.subr.mxu0 0.0
    %232 = vmatpush1.msra.mxu0 0.0
    %233 = vmatprep.subr.mxu0 0.0
    %234 = vmatpush1.msra.mxu0 0.0
    %235 = vmatprep.subr.mxu0 0.0
    %236 = vmatpush1.msra.mxu0 0.0
    %237 = vmatprep.subr.mxu0 0.0
    %238 = vmatpush1.msra.mxu0 0.0
    %239 = vmatprep.subr.mxu0 0.0
    %240 = vmatpush1.msra.mxu0 0.0
    %241 = vmatprep.subr.mxu0 0.0
    %242 = vmatpush1.msra.mxu0 0.0
    %243 = vmatprep.subr.mxu0 0.0
    %244 = vmatpush1.msra.mxu0 0.0
    %245 = vmatprep.subr.mxu0 0.0
    %246 = vmatpush1.msra.mxu0 0.0
    %247 = vmatprep.subr.mxu0 0.0
    %248 = vmatpush1.msra.mxu0 0.0
    %249 = vmatprep.subr.mxu0 0.0
    %250 = vmatpush1.msra.mxu0 0.0
    %251 = vmatprep.subr.mxu0 0.0
    %252 = vmatpush1.msra.mxu0 0.0
    %253 = vmatprep.mubr.f32.mxu0 0.0
    %254 = vmatmul.mubr.f32.gmra.mrb[0].mxu0 %v165
    %v255 = vpop.f32.mrb[0].mxu0
    %v256 = vadd.f32 %v187, %v255
    %v257 = vpop.f32.mrb[0].mxu0
    %258 = vdwg.mxu0
    %v259 = vmul.f32 %v256, 0.2
    %v260 = vmax.f32 %v256, %v259
    %v261 = vld [vmem:[#allocation8] sm:$0xff]
    %v262 = vld [vmem:[#allocation8 + $0x8] sm:$0xff]
    %v263 = vld [vmem:[#allocation8 + $0x10] sm:$0xff]
    %v264 = vld [vmem:[#allocation8 + $0x18] sm:$0xff]
    %v265 = vld [vmem:[#allocation8 + $0x20] sm:$0xff]
    %v266 = vld [vmem:[#allocation8 + $0x28] sm:$0xff]
    %v267 = vld [vmem:[#allocation8 + $0x30] sm:$0xff]
    %v268 = vld [vmem:[#allocation8 + $0x38] sm:$0xff]
    %v269 = vld [vmem:[#allocation8 + $0x40] sm:$0xff]
    %v270 = vld [vmem:[#allocation8 + $0x48] sm:$0xff]
    %v271 = vld [vmem:[#allocation8 + $0x50] sm:$0xff]
    %v272 = vld [vmem:[#allocation8 + $0x58] sm:$0xff]
    %v273 = vld [vmem:[#allocation8 + $0x60] sm:$0xff]
    %v274 = vld [vmem:[#allocation8 + $0x68] sm:$0xff]
    %v275 = vld [vmem:[#allocation8 + $0x70] sm:$0xff]
    %v276 = vld [vmem:[#allocation8 + $0x78] sm:$0xff]
    %v277 = vld [vmem:[%s6] sm:$0x1]
    %v279 = vlaneseq
    %v280 = vshrl.u32 %v279, 7
    %v281 = vsub.s32 0, %v280
    %v282 = vrot.slane %v277, %v281
    %284 = vmatprep.subr.mxu0 0.0
    %285 = vmatpush1.msra.mxu0 %v261
    %286 = vmatprep.subr.mxu0 0.0
    %287 = vmatpush1.msra.mxu0 %v262
    %288 = vmatprep.subr.mxu0 0.0
    %289 = vmatpush1.msra.mxu0 %v263
    %290 = vmatprep.subr.mxu0 0.0
    %291 = vmatpush1.msra.mxu0 %v264
    %292 = vmatprep.subr.mxu0 0.0
    %293 = vmatpush1.msra.mxu0 %v265
    %294 = vmatprep.subr.mxu0 0.0
    %295 = vmatpush1.msra.mxu0 %v266
    %296 = vmatprep.subr.mxu0 0.0
    %297 = vmatpush1.msra.mxu0 %v267
    %298 = vmatprep.subr.mxu0 0.0
    %299 = vmatpush1.msra.mxu0 %v268
    %300 = vmatprep.subr.mxu0 0.0
    %301 = vmatpush1.msra.mxu0 %v269
    %302 = vmatprep.subr.mxu0 0.0
    %303 = vmatpush1.msra.mxu0 %v270
    %304 = vmatprep.subr.mxu0 0.0
    %305 = vmatpush1.msra.mxu0 %v271
    %306 = vmatprep.subr.mxu0 0.0
    %307 = vmatpush1.msra.mxu0 %v272
    %308 = vmatprep.subr.mxu0 0.0
    %309 = vmatpush1.msra.mxu0 %v273
    %310 = vmatprep.subr.mxu0 0.0
    %311 = vmatpush1.msra.mxu0 %v274
    %312 = vmatprep.subr.mxu0 0.0
    %313 = vmatpush1.msra.mxu0 %v275
    %314 = vmatprep.subr.mxu0 0.0
    %315 = vmatpush1.msra.mxu0 %v276
    %316 = vmatprep.subr.mxu0 0.0
    %317 = vmatpush1.msra.mxu0 0.0
    %318 = vmatprep.subr.mxu0 0.0
    %319 = vmatpush1.msra.mxu0 0.0
    %320 = vmatprep.subr.mxu0 0.0
    %321 = vmatpush1.msra.mxu0 0.0
    %322 = vmatprep.subr.mxu0 0.0
    %323 = vmatpush1.msra.mxu0 0.0
    %324 = vmatprep.subr.mxu0 0.0
    %325 = vmatpush1.msra.mxu0 0.0
    %326 = vmatprep.subr.mxu0 0.0
    %327 = vmatpush1.msra.mxu0 0.0
    %328 = vmatprep.subr.mxu0 0.0
    %329 = vmatpush1.msra.mxu0 0.0
    %330 = vmatprep.subr.mxu0 0.0
    %331 = vmatpush1.msra.mxu0 0.0
    %332 = vmatprep.subr.mxu0 0.0
    %333 = vmatpush1.msra.mxu0 0.0
    %334 = vmatprep.subr.mxu0 0.0
    %335 = vmatpush1.msra.mxu0 0.0
    %336 = vmatprep.subr.mxu0 0.0
    %337 = vmatpush1.msra.mxu0 0.0
    %338 = vmatprep.subr.mxu0 0.0
    %339 = vmatpush1.msra.mxu0 0.0
    %340 = vmatprep.subr.mxu0 0.0
    %341 = vmatpush1.msra.mxu0 0.0
    %342 = vmatprep.subr.mxu0 0.0
    %343 = vmatpush1.msra.mxu0 0.0
    %344 = vmatprep.subr.mxu0 0.0
    %345 = vmatpush1.msra.mxu0 0.0
    %346 = vmatprep.subr.mxu0 0.0
    %347 = vmatpush1.msra.mxu0 0.0
    %348 = vmatprep.mubr.f32.mxu0 0.0
    %349 = vmatmul.mubr.f32.gmra.mrb[0].mxu0 %v260
    %v350 = vpop.f32.mrb[0].mxu0
    %v351 = vadd.f32 %v282, %v350
    %v352 = vpop.f32.mrb[0].mxu0
    %353 = vdwg.mxu0
    %v354 = vxor.u32 %v351, 2147483648
    %v355 = vmul.f32 %v354, 1.442695
    %v356 = vpow.pop %v355
    %v357 = vadd.f32 %v356, 1.0
    %v358 = vrcp.pop %v357
    %v359 = vmul.f32 1.0, %v358
    %360 = vst [vmem:[#allocation10] sm:$0xff] %v359
    // Predicated region
    $region46: #{tpu_custom_call.1} parent=1 // pred_check
      _
    $region47: #{tpu_custom_call.1} parent=1 // pred_check_branch
      %362 = sbr.rel (0) target = $region49
    $region48: #{tpu_custom_call.1} parent=1 // pred_region
      %s364 = ssub.s32 128, 128
      %365 = vsyncadd [#allocation4], %s364
      %s367 = sshll.u32 [#allocation10], 4
      %s368 = int_to_ptr.vmem [resolvable:$true] %s367
      %370 = dma.vmem_to_hbm [thread:$0]  %s368, 128, %s7, [#allocation4]
    $region49: #{tpu_custom_call.1} parent=1 // pred_fallthru
      _
    // Predicated region
    $region50: #{tpu_custom_call.1} parent=1 // pred_check
      _
    $region51: #{tpu_custom_call.1} parent=1 // pred_check_branch
      %372 = sbr.rel (0) target = $region53
    $region52: #{tpu_custom_call.1} parent=1 // pred_region
      %373 = dma.done [#allocation4], 128
    $region53: #{tpu_custom_call.1} parent=1 // pred_fallthru
      _
    %374 = vsyncpa [#allocation3], 1
    %375 = vsyncpa [#allocation6], 1
    %376 = vsyncpa [#allocation9], 1
    %377 = vsyncpa [#allocation4], 1

</llo_original>
